<compile_context>
chip_gen: v7x
topology: tpu7x:2x2x1
jax: 0.10.0
libtpu: 0.0.40
codegen_flags: <defaults>
</compile_context>

<pallas_src>
import functools

import jax
import jax.numpy as jnp
from jax import lax
from jax.experimental import pallas as pl
from jax.experimental.pallas import tpu as pltpu

_LANES = 128


def _select_tuning():
    """Pick (block_rows, vmem_limit_bytes) from the chip's VMEM capacity."""
    try:
        vmem = pltpu.get_tpu_info().vmem_capacity_bytes
    except Exception:  # defensive: fall back to the v7x-safe setting
        vmem = 64 * 1024 * 1024
    if vmem >= 96 * 1024 * 1024:
        # v5e / v6e: 128 MiB physical VMEM.  8 MiB f32 per input block,
        # 2 inputs x 2 pipeline buffers = 32 MiB resident.
        return 16384, 96 * 1024 * 1024
    # v7x: 64 MiB physical VMEM per TensorCore.  16 MiB double-buffered.
    return 8192, 48 * 1024 * 1024


def _dice_kernel(x_ref, t_ref, out_ref, inter_acc, denom_acc, *,
                 apply_sigmoid, total_rows, block_rows, n_blocks,
                 blocks_per_split, needs_mask, may_overrun):
    c = pl.program_id(0)            # split ("megacore") axis
    i = pl.program_id(1)            # reduction axis within a split
    block_id = c * blocks_per_split + i

    @pl.when(i == 0)
    def _init():
        inter_acc[...] = jnp.zeros_like(inter_acc)
        denom_acc[...] = jnp.zeros_like(denom_acc)

    x = x_ref[...].astype(jnp.float32)
    t = t_ref[...].astype(jnp.float32)
    if apply_sigmoid:
        x = jax.nn.sigmoid(x)

    def _accumulate(xv, tv):
        # Per-lane running sums; the single cross-lane reduce happens in the
        # wrapper on the (num_splits, 2, 128) partials.
        inter_acc[...] += jnp.sum(xv * tv, axis=0, keepdims=True)
        denom_acc[...] += jnp.sum(xv + tv, axis=0, keepdims=True)

    last_block = n_blocks - 1
    if needs_mask:
        # Unmasked fast path for every full block ...
        @pl.when(block_id < last_block)
        def _full():
            _accumulate(x, t)

        # ... masked epilogue only for the single ragged last block.  Only a
        # row mask is needed: the <=127-element lane tail is handled in the
        # wrapper, so only whole overhang rows can carry garbage.
        @pl.when(block_id == last_block)
        def _ragged():
            row = lax.broadcasted_iota(jnp.int32, (block_rows, 1), 0)
            valid = (last_block * block_rows + row) < total_rows
            _accumulate(jnp.where(valid, x, 0.0), jnp.where(valid, t, 0.0))
    elif may_overrun:
        # n_blocks not divisible by the split count: the last split has one
        # phantom (clamped, re-read) step that must not be accumulated.
        @pl.when(block_id < n_blocks)
        def _guarded():
            _accumulate(x, t)
    else:
        _accumulate(x, t)

    @pl.when(i == blocks_per_split - 1)
    def _finalize():
        out_ref[0, 0:1, :] = inter_acc[...]
        out_ref[0, 1:2, :] = denom_acc[...]


def dice_loss(inputs, targets, smooth=1e-06, apply_sigmoid=False,
              block_rows=None, num_splits=2):
    """Pallas implementation of DiceLoss.forward. Returns a scalar float32."""
    x = jnp.ravel(inputs)
    t = jnp.ravel(targets)
    n = x.shape[0]

    max_rows, vmem_limit = _select_tuning()
    if block_rows is None:
        block_rows = max_rows

    total_rows = n // _LANES            # 128-aligned body rows
    body = total_rows * _LANES

    def _partial_sums(xs, ts):
        xs = xs.astype(jnp.float32)
        ts = ts.astype(jnp.float32)
        if apply_sigmoid:
            xs = jax.nn.sigmoid(xs)
        return jnp.sum(xs * ts), jnp.sum(xs) + jnp.sum(ts)

    if total_rows == 0:
        # Tiny input (< 128 elements): nothing to stream through the kernel.
        inter, denom = _partial_sums(x, t)
        dice = (2.0 * inter + smooth) / (denom + smooth)
        return (1.0 - dice).astype(jnp.float32)

    if body < n:
        # <=127-element ragged tail: a handful of scalar flops in plain XLA.
        # This replaces the previous full-array jnp.pad copy on ragged inputs.
        tail_inter, tail_denom = _partial_sums(x[body:], t[body:])
        x = x[:body]
        t = t[:body]
    else:
        tail_inter = 0.0
        tail_denom = 0.0

    x2 = x.reshape(total_rows, _LANES)
    t2 = t.reshape(total_rows, _LANES)

    # Small inputs: single full-extent block (allowed even if rows % 8 != 0).
    block_rows = int(min(block_rows, total_rows))
    n_blocks = -(-total_rows // block_rows)
    num_splits = int(num_splits) if n_blocks >= 2 else 1
    blocks_per_split = -(-n_blocks // num_splits)
    needs_mask = (total_rows % block_rows) != 0
    may_overrun = (n_blocks % num_splits) != 0

    kernel = functools.partial(
        _dice_kernel,
        apply_sigmoid=bool(apply_sigmoid),
        total_rows=int(total_rows),
        block_rows=int(block_rows),
        n_blocks=int(n_blocks),
        blocks_per_split=int(blocks_per_split),
        needs_mask=bool(needs_mask),
        may_overrun=bool(may_overrun),
    )

    def in_map(c, i):
        # Clamp so the (at most one) phantom step of the last split re-reads
        # an in-range block instead of DMA-ing past the array edge; its
        # contribution is gated off inside the kernel.
        return (jnp.minimum(c * blocks_per_split + i, n_blocks - 1), 0)

    partials = pl.pallas_call(
        kernel,
        out_shape=jax.ShapeDtypeStruct((num_splits, 2, _LANES), jnp.float32),
        grid_spec=pltpu.PrefetchScalarGridSpec(
            num_scalar_prefetch=0,
            grid=(num_splits, blocks_per_split),
            in_specs=[
                pl.BlockSpec((block_rows, _LANES), in_map),
                pl.BlockSpec((block_rows, _LANES), in_map),
            ],
            out_specs=pl.BlockSpec((1, 2, _LANES), lambda c, i: (c, 0, 0)),
            scratch_shapes=[
                pltpu.VMEM((1, _LANES), jnp.float32),  # per-lane intersection
                pltpu.VMEM((1, _LANES), jnp.float32),  # per-lane sum(x)+sum(t)
            ],
        ),
        compiler_params=pltpu.CompilerParams(
            dimension_semantics=("parallel", "arbitrary"),
            vmem_limit_bytes=vmem_limit,
        ),
    )(x2, t2)

    inter = jnp.sum(partials[:, 0, :]) + tail_inter
    denom = jnp.sum(partials[:, 1, :]) + tail_denom
    dice = (2.0 * inter + smooth) / (denom + smooth)
    return (1.0 - dice).astype(jnp.float32)


def _dice_loss_ref(inputs, targets, smooth=1e-06, apply_sigmoid=False):
    x = jnp.ravel(inputs).astype(jnp.float32)
    t = jnp.ravel(targets).astype(jnp.float32)
    if apply_sigmoid:
        x = jax.nn.sigmoid(x)
    inter = jnp.sum(x * t)
    dice = (2.0 * inter + smooth) / (jnp.sum(x) + jnp.sum(t) + smooth)
    return 1.0 - dice


if __name__ == "__main__":
    key = jax.random.PRNGKey(0)
    k1, k2 = jax.random.split(key)

    # 1) NCHW example (predicted probabilities and binary targets), 128-aligned.
    x = jax.random.uniform(k1, (2, 4, 16, 16), dtype=jnp.float32)
    t = (jax.random.uniform(k2, (2, 4, 16, 16), dtype=jnp.float32) > 0.5).astype(
        jnp.float32
    )
    loss = dice_loss(x, t, smooth=1e-06, apply_sigmoid=False)
    jax.block_until_ready(loss)
    ref = _dice_loss_ref(x, t, smooth=1e-06, apply_sigmoid=False)
    assert jnp.allclose(loss, ref, rtol=1e-5, atol=1e-6), (loss, ref)

    # 2) Ragged lane tail + sigmoid path (945 elements, not a multiple of 128).
    x2 = jax.random.normal(k1, (3, 5, 7, 9), dtype=jnp.float32)
    t2 = (jax.random.uniform(k2, (3, 5, 7, 9)) > 0.5).astype(jnp.float32)
    loss2 = dice_loss(x2, t2, smooth=1e-06, apply_sigmoid=True)
    jax.block_until_ready(loss2)
    ref2 = _dice_loss_ref(x2, t2, smooth=1e-06, apply_sigmoid=True)
    assert jnp.allclose(loss2, ref2, rtol=1e-5, atol=1e-6), (loss2, ref2)

    # 3) Multi-block + 2-way split + ragged last block (exercises the clamped
    #    phantom step and the row mask) using a small explicit block_rows.
    x3 = jax.random.uniform(k1, (3, 4, 100, 128), dtype=jnp.float32)
    t3 = (jax.random.uniform(k2, (3, 4, 100, 128)) > 0.5).astype(jnp.float32)
    loss3 = dice_loss(x3, t3, smooth=1e-06, apply_sigmoid=False, block_rows=512)
    jax.block_until_ready(loss3)
    ref3 = _dice_loss_ref(x3, t3, smooth=1e-06, apply_sigmoid=False)
    assert jnp.allclose(loss3, ref3, rtol=1e-5, atol=1e-6), (loss3, ref3)

    print("KERNEL_OK")
</pallas_src>

<mosaic_0001>
module attributes {stable_mosaic.version = 11 : i64} {
  func.func @_dice_kernel(%arg0: i32, %arg1: i32, %arg2: memref<16x128xf32, #tpu.memory_space<vmem>>, %arg3: memref<16x128xf32, #tpu.memory_space<vmem>>, %arg4: memref<1x2x128xf32, #tpu.memory_space<vmem>>, %arg5: memref<1x128xf32, #tpu.memory_space<vmem>>, %arg6: memref<1x128xf32, #tpu.memory_space<vmem>>) attributes {dimension_semantics = [#tpu.dimension_semantics<parallel>, #tpu.dimension_semantics<arbitrary>], iteration_bounds = array<i64: 1, 1>, scalar_prefetch = 0 : i64, scratch_operands = 2 : i64, tpu.core_type = #tpu.core_type<tc>, window_params = [{transform_indices = @transform_0, window_bounds = array<i64: 16, 128>}, {transform_indices = @transform_1, window_bounds = array<i64: 16, 128>}, {transform_indices = @transform_2, window_bounds = array<i64: 1, 2, 128>}]} {
    %c0_i32 = arith.constant 0 : i32
    %0 = arith.cmpi eq, %arg1, %c0_i32 : i32
    %1 = arith.extui %0 : i1 to i32
    %c0_i32_0 = arith.constant 0 : i32
    %2 = arith.cmpi ne, %1, %c0_i32_0 : i32
    scf.if %2 {
      %cst_15 = arith.constant 0.000000e+00 : f32
      %20 = vector.broadcast %cst_15 : f32 to vector<1x128xf32>
      %c0_16 = arith.constant 0 : index
      %c0_17 = arith.constant 0 : index
      %21 = vector.load %arg5[%c0_16, %c0_17] : memref<1x128xf32, #tpu.memory_space<vmem>>, vector<1x128xf32>
      tpu.vector_store %arg5[%c0_16, %c0_17], %20 {strides = array<i32>} : memref<1x128xf32, #tpu.memory_space<vmem>>, vector<1x128xf32>,
      %cst_18 = arith.constant 0.000000e+00 : f32
      %22 = vector.broadcast %cst_18 : f32 to vector<1x128xf32>
      %c0_19 = arith.constant 0 : index
      %c0_20 = arith.constant 0 : index
      %23 = vector.load %arg6[%c0_19, %c0_20] : memref<1x128xf32, #tpu.memory_space<vmem>>, vector<1x128xf32>
      tpu.vector_store %arg6[%c0_19, %c0_20], %22 {strides = array<i32>} : memref<1x128xf32, #tpu.memory_space<vmem>>, vector<1x128xf32>,
    } else {
    }
    %c0 = arith.constant 0 : index
    %c0_1 = arith.constant 0 : index
    %3 = vector.load %arg2[%c0, %c0_1] : memref<16x128xf32, #tpu.memory_space<vmem>>, vector<16x128xf32>
    %c0_2 = arith.constant 0 : index
    %c0_3 = arith.constant 0 : index
    %4 = vector.load %arg3[%c0_2, %c0_3] : memref<16x128xf32, #tpu.memory_space<vmem>>, vector<16x128xf32>
    %c0_4 = arith.constant 0 : index
    %c0_5 = arith.constant 0 : index
    %5 = vector.load %arg5[%c0_4, %c0_5] : memref<1x128xf32, #tpu.memory_space<vmem>>, vector<1x128xf32>
    %6 = arith.mulf %3, %4 : vector<16x128xf32>
    %cst = arith.constant dense<0.000000e+00> : vector<128xf32>
    %7 = vector.multi_reduction <add>, %6, %cst [0] : vector<16x128xf32> to vector<128xf32>
    %8 = vector.shape_cast %7 : vector<128xf32> to vector<1x128xf32>
    %9 = arith.addf %5, %8 : vector<1x128xf32>
    %c0_6 = arith.constant 0 : index
    %c0_7 = arith.constant 0 : index
    %10 = vector.load %arg5[%c0_6, %c0_7] : memref<1x128xf32, #tpu.memory_space<vmem>>, vector<1x128xf32>
    tpu.vector_store %arg5[%c0_6, %c0_7], %9 {strides = array<i32>} : memref<1x128xf32, #tpu.memory_space<vmem>>, vector<1x128xf32>,
    %c0_8 = arith.constant 0 : index
    %c0_9 = arith.constant 0 : index
    %11 = vector.load %arg6[%c0_8, %c0_9] : memref<1x128xf32, #tpu.memory_space<vmem>>, vector<1x128xf32>
    %12 = arith.addf %3, %4 : vector<16x128xf32>
    %cst_10 = arith.constant dense<0.000000e+00> : vector<128xf32>
    %13 = vector.multi_reduction <add>, %12, %cst_10 [0] : vector<16x128xf32> to vector<128xf32>
    %14 = vector.shape_cast %13 : vector<128xf32> to vector<1x128xf32>
    %15 = arith.addf %11, %14 : vector<1x128xf32>
    %c0_11 = arith.constant 0 : index
    %c0_12 = arith.constant 0 : index
    %16 = vector.load %arg6[%c0_11, %c0_12] : memref<1x128xf32, #tpu.memory_space<vmem>>, vector<1x128xf32>
    tpu.vector_store %arg6[%c0_11, %c0_12], %15 {strides = array<i32>} : memref<1x128xf32, #tpu.memory_space<vmem>>, vector<1x128xf32>,
    %c0_i32_13 = arith.constant 0 : i32
    %17 = arith.cmpi eq, %arg1, %c0_i32_13 : i32
    %18 = arith.extui %17 : i1 to i32
    %c0_i32_14 = arith.constant 0 : i32
    %19 = arith.cmpi ne, %18, %c0_i32_14 : i32
    scf.if %19 {
      %c0_15 = arith.constant 0 : index
      %c0_16 = arith.constant 0 : index
      %20 = vector.load %arg5[%c0_15, %c0_16] : memref<1x128xf32, #tpu.memory_space<vmem>>, vector<1x128xf32>
      %c0_17 = arith.constant 0 : index
      %c0_18 = arith.constant 0 : index
      %c0_19 = arith.constant 0 : index
      %21 = vector.load %arg4[%c0_17, %c0_18, %c0_19] : memref<1x2x128xf32, #tpu.memory_space<vmem>>, vector<1x1x128xf32>
      %22 = vector.shape_cast %21 : vector<1x1x128xf32> to vector<1x128xf32>
      %23 = vector.shape_cast %20 : vector<1x128xf32> to vector<1x1x128xf32>
      tpu.vector_store %arg4[%c0_17, %c0_18, %c0_19], %23 {strides = array<i32>} : memref<1x2x128xf32, #tpu.memory_space<vmem>>, vector<1x1x128xf32>,
      %c0_20 = arith.constant 0 : index
      %c0_21 = arith.constant 0 : index
      %24 = vector.load %arg6[%c0_20, %c0_21] : memref<1x128xf32, #tpu.memory_space<vmem>>, vector<1x128xf32>
      %c0_22 = arith.constant 0 : index
      %c1 = arith.constant 1 : index
      %c0_23 = arith.constant 0 : index
      %25 = vector.load %arg4[%c0_22, %c1, %c0_23] : memref<1x2x128xf32, #tpu.memory_space<vmem>>, vector<1x1x128xf32>
      %26 = vector.shape_cast %25 : vector<1x1x128xf32> to vector<1x128xf32>
      %27 = vector.shape_cast %24 : vector<1x128xf32> to vector<1x1x128xf32>
      tpu.vector_store %arg4[%c0_22, %c1, %c0_23], %27 {strides = array<i32>} : memref<1x2x128xf32, #tpu.memory_space<vmem>>, vector<1x1x128xf32>,
    } else {
    }
    return
  }
  func.func @transform_0(%arg0: i32, %arg1: i32) -> (i32, i32) {
    %c1_i32 = arith.constant 1 : i32
    %0 = arith.muli %arg0, %c1_i32 : i32
    %1 = arith.addi %0, %arg1 : i32
    %c0_i32 = arith.constant 0 : i32
    %2 = arith.minsi %1, %c0_i32 : i32
    %c0_i32_0 = arith.constant 0 : i32
    %c0_i32_1 = arith.constant 0 : i32
    return %2, %c0_i32_0 : i32, i32
  }
  func.func @transform_1(%arg0: i32, %arg1: i32) -> (i32, i32) {
    %c1_i32 = arith.constant 1 : i32
    %0 = arith.muli %arg0, %c1_i32 : i32
    %1 = arith.addi %0, %arg1 : i32
    %c0_i32 = arith.constant 0 : i32
    %2 = arith.minsi %1, %c0_i32 : i32
    %c0_i32_0 = arith.constant 0 : i32
    %c0_i32_1 = arith.constant 0 : i32
    return %2, %c0_i32_0 : i32, i32
  }
  func.func @transform_2(%arg0: i32, %arg1: i32) -> (i32, i32, i32) {
    %c0_i32 = arith.constant 0 : i32
    %c0_i32_0 = arith.constant 0 : i32
    %c0_i32_1 = arith.constant 0 : i32
    return %arg0, %c0_i32, %c0_i32_0 : i32, i32, i32
  }
}

</mosaic_0001>

<llo_original>
// kernel: tpu_custom_call.1
$region0: #{tpu_custom_call.1}
  #allocation0 [shape = 'u32[]', space=smem, size = 0x4, offset = 0x4, fixed_abs, tag = 'smem constant byte address 0x4 - core index']
  #allocation1 [shape = 'u32[144,128]{1,0:T(1,128)}', space=vmem, size = 0x12000, scoped, tag = 'internal scratch']
  #allocation2 [shape = 'f32[1,128]{1,0:T(1,128)}', space=vmem, size = 0x200, scoped, tag = 'scratch operand']
  #allocation3 [shape = 'f32[1,128]{1,0:T(1,128)}', space=vmem, size = 0x200, scoped, tag = 'scratch operand']
  %s0 = inlined_call_operand.hbm [shape: f32[16,128], index: 0, kind: input, shape index: {}]
  %s1 = inlined_call_operand.hbm [shape: f32[16,128], index: 1, kind: input, shape index: {}]
  %s2 = inlined_call_operand.hbm [shape: f32[1,2,128], index: 2, kind: output, shape index: {}]
  %s3 = sld [smem:[#allocation0]]
  $region34: #{tpu_custom_call.1} parent=0
    _
  %s5 = ssub.s32 1, %s3
  %s6 = scalar_select 0, %s5, %s3
  $region1: #{tpu_custom_call.1} parent=0
    #allocation4 [shape = 'u8[8192]{0}', space=vmem, size = 0x2000, scoped, tag = 'input window, operand 0, single buffered']
    #allocation5 [shape = 's32[1]{0}', space=sflag, size = 0x4, scoped, tag = 'scoped memory for tpu_custom_call.1']
    #allocation6 [shape = 's32[1]{0}', space=sflag, size = 0x4, scoped, tag = 'scoped memory for tpu_custom_call.1']
    #allocation7 [shape = 'u8[8192]{0}', space=vmem, size = 0x2000, scoped, tag = 'input window, operand 1, single buffered']
    #allocation8 [shape = 's32[1]{0}', space=sflag, size = 0x4, scoped, tag = 'scoped memory for tpu_custom_call.1']
    #allocation9 [shape = 'u8[1024]{0}', space=vmem, size = 0x400, scoped, tag = 'output window, operand 0, single buffered']
    %7 = vsyncpa [#allocation5], 0
    %8 = vsyncpa [#allocation8], 0
    %9 = vsyncpa [#allocation6], 0
    // Predicated region
    $region2: #{tpu_custom_call.1} parent=1 // pred_check
      _
    $region3: #{tpu_custom_call.1} parent=1 // pred_check_branch
      %11 = sbr.rel (0) target = $region5
    $region4: #{tpu_custom_call.1} parent=1 // pred_region
      %s12 = sadd.s32 0, 0
      %p13 = scmp.lt.s32.totalorder %s12, 0
      %s14 = scalar_select %p13, %s12, 0
      %s15 = smul.u32 2, %s14
      %s17 = ssub.s32 256, 256
      %18 = vsyncadd [#allocation5], %s17
      %s19 = smul.addr %s15, 128
      %s20 = scalar_lea.hbm %s0, %s19
      %s21 = sshll.u32 [#allocation4], 4
      %s22 = int_to_ptr.vmem [resolvable:$true] %s21
      %27 = dma.hbm_to_vmem [thread:$0]  %s20, 256, %s22, [#allocation5], 128, 128, 8
    $region5: #{tpu_custom_call.1} parent=1 // pred_fallthru
      _
    // Predicated region
    $region6: #{tpu_custom_call.1} parent=1 // pred_check
      _
    $region7: #{tpu_custom_call.1} parent=1 // pred_check_branch
      %29 = sbr.rel (0) target = $region9
    $region8: #{tpu_custom_call.1} parent=1 // pred_region
      %s30 = sadd.s32 0, 0
      %p31 = scmp.lt.s32.totalorder %s30, 0
      %s32 = scalar_select %p31, %s30, 0
      %s33 = smul.u32 2, %s32
      %s35 = ssub.s32 256, 256
      %36 = vsyncadd [#allocation8], %s35
      %s37 = smul.addr %s33, 128
      %s38 = scalar_lea.hbm %s1, %s37
      %s39 = sshll.u32 [#allocation7], 4
      %s40 = int_to_ptr.vmem [resolvable:$true] %s39
      %45 = dma.hbm_to_vmem [thread:$0]  %s38, 256, %s40, [#allocation8], 128, 128, 8
    $region9: #{tpu_custom_call.1} parent=1 // pred_fallthru
      _
    // Predicated region
    $region10: #{tpu_custom_call.1} parent=1 // pred_check
      _
    $region11: #{tpu_custom_call.1} parent=1 // pred_check_branch
      %47 = sbr.rel (0) target = $region13
    $region12: #{tpu_custom_call.1} parent=1 // pred_region
      %48 = dma.done [#allocation5], 256
    $region13: #{tpu_custom_call.1} parent=1 // pred_fallthru
      _
    // Predicated region
    $region14: #{tpu_custom_call.1} parent=1 // pred_check
      _
    $region15: #{tpu_custom_call.1} parent=1 // pred_check_branch
      %50 = sbr.rel (0) target = $region17
    $region16: #{tpu_custom_call.1} parent=1 // pred_region
      %51 = dma.done [#allocation8], 256
    $region17: #{tpu_custom_call.1} parent=1 // pred_fallthru
      _
    %s52 = sadd.s32 0, 0
    %p53 = scmp.lt.s32.totalorder %s52, 0
    %s54 = scalar_select %p53, %s52, 0
    %s55 = smul.u32 2, %s54
    %s56 = sadd.s32 0, 0
    %p57 = scmp.lt.s32.totalorder %s56, 0
    %s58 = scalar_select %p57, %s56, 0
    %s59 = smul.u32 2, %s58
    %p60 = scmp.eq.s32.totalorder 0, 0
    // Predicated region
    $region18: #{tpu_custom_call.1} parent=1 // pred_check
      %p61 = pneg %p60
    $region19: #{tpu_custom_call.1} parent=1 // pred_check_branch
      %63 = sbr.rel (%p61) target = $region21
    $region20: #{tpu_custom_call.1} parent=1 // pred_region
      %64 = vst [vmem:[#allocation2] sm:$0x1] 0.0
      %65 = vst [vmem:[#allocation3] sm:$0x1] 0.0
    $region21: #{tpu_custom_call.1} parent=1 // pred_fallthru
      _
    %v66 = vld [vmem:[#allocation4] sm:$0xff]
    %v67 = vld [vmem:[#allocation4 + $0x8] sm:$0xff]
    %v68 = vld [vmem:[#allocation7] sm:$0xff]
    %v69 = vld [vmem:[#allocation7 + $0x8] sm:$0xff]
    %v70 = vld [vmem:[#allocation2] sm:$0x1]
    %v71 = vmul.f32 %v66, %v68
    %v72 = vmul.f32 %v67, %v69
    %v73 = vadd.f32 %v71, %v72
    %v74 = vrot.slane %v73, 4
    %v75 = vadd.f32 %v73, %v74
    %v76 = vrot.slane %v75, 2
    %v77 = vadd.f32 %v75, %v76
    %v78 = vrot.slane %v77, 1
    %v79 = vadd.f32 %v77, %v78
    %v80 = vadd.f32 %v70, %v79
    %81 = vst [vmem:[#allocation2] sm:$0x1] %v80
    %v82 = vld [vmem:[#allocation3] sm:$0x1]
    %v83 = vadd.f32 %v66, %v68
    %v84 = vadd.f32 %v67, %v69
    %v85 = vadd.f32 %v83, %v84
    %v86 = vrot.slane %v85, 4
    %v87 = vadd.f32 %v85, %v86
    %v88 = vrot.slane %v87, 2
    %v89 = vadd.f32 %v87, %v88
    %v90 = vrot.slane %v89, 1
    %v91 = vadd.f32 %v89, %v90
    %v92 = vadd.f32 %v82, %v91
    %93 = vst [vmem:[#allocation3] sm:$0x1] %v92
    // Predicated region
    $region22: #{tpu_custom_call.1} parent=1 // pred_check
      %p94 = pneg %p60
    $region23: #{tpu_custom_call.1} parent=1 // pred_check_branch
      %96 = sbr.rel (%p94) target = $region25
    $region24: #{tpu_custom_call.1} parent=1 // pred_region
      %v97 = vld [vmem:[#allocation2] sm:$0x1]
      %98 = vst [vmem:[#allocation9] sm:$0x1] %v97
      %v99 = vld [vmem:[#allocation3] sm:$0x1]
      %100 = vst [vmem:[#allocation9 + $0x1] sm:$0x1] %v99
    $region25: #{tpu_custom_call.1} parent=1 // pred_fallthru
      _
    // Predicated region
    $region26: #{tpu_custom_call.1} parent=1 // pred_check
      _
    $region27: #{tpu_custom_call.1} parent=1 // pred_check_branch
      %102 = sbr.rel (0) target = $region29
    $region28: #{tpu_custom_call.1} parent=1 // pred_region
      %s104 = ssub.s32 32, 32
      %105 = vsyncadd [#allocation6], %s104
      %s107 = sshll.u32 [#allocation9], 4
      %s108 = int_to_ptr.vmem [resolvable:$true] %s107
      %110 = dma.vmem_to_hbm [thread:$0]  %s108, 32, %s2, [#allocation6]
    $region29: #{tpu_custom_call.1} parent=1 // pred_fallthru
      _
    // Predicated region
    $region30: #{tpu_custom_call.1} parent=1 // pred_check
      _
    $region31: #{tpu_custom_call.1} parent=1 // pred_check_branch
      %112 = sbr.rel (0) target = $region33
    $region32: #{tpu_custom_call.1} parent=1 // pred_region
      %113 = dma.done [#allocation6], 32
    $region33: #{tpu_custom_call.1} parent=1 // pred_fallthru
      _
    %114 = vsyncpa [#allocation5], 1
    %115 = vsyncpa [#allocation8], 1
    %116 = vsyncpa [#allocation6], 1

</llo_original>
